<compile_context>
chip_gen: v7x
topology: tpu7x:2x2x1
jax: 0.10.0
libtpu: 0.0.40
codegen_flags: <defaults>
</compile_context>

<pallas_src>
import functools

import jax
import jax.numpy as jnp
from jax.experimental import pallas as pl
from jax.experimental.pallas import tpu as pltpu

NUM_FTRS = 32                     # embedding dim before projection head (MoCo default)
OUT_DIM = 128                     # projection output dim (MoCo default)
MOMENTUM = 0.999

F_PAD = 128                       # NUM_FTRS padded to full lane width
_VMEM_BUDGET = 12 * 1024 * 1024   # target working set (fits v5e/v6e/v7x scoped VMEM)
_VMEM_LIMIT = 32 * 1024 * 1024    # explicit scoped-VMEM limit (safe on all generations)
# MXU input dtype: bf16 inputs / f32 accumulation (elementwise math stays f32,
# which v5e requires anyway).  Set to jnp.float32 for bit-exact f32 matmuls.
MXU_DTYPE = jnp.bfloat16

_PARAM_KEYS = ("wb", "bias", "w1", "w2")
_VMEM_FULL = pl.BlockSpec(memory_space=pltpu.MemorySpace.VMEM)


def _round_up(x, n):
    return (x + n - 1) // n * n


# ---------------------------------------------------------------------------
# Kernel bodies
# ---------------------------------------------------------------------------
def _mxu_dot(a, b):
    """MXU matmul with MXU_DTYPE inputs and f32 accumulation."""
    return jnp.dot(a.astype(MXU_DTYPE), b.astype(MXU_DTYPE),
                   preferred_element_type=jnp.float32)


def _head(pooled, wb, bias, w1, w2):
    """Backbone linear + projection head on a pooled (TB, C) f32 tile.

    All feature dims are padded to 128 lanes; padding rows/cols of the weights
    and biases are zero so the padded region of f / out stays exactly zero.
    """
    f = jnp.maximum(_mxu_dot(pooled, wb) + bias[0:1, :], 0.0)   # backbone Linear+ReLU
    h = jnp.maximum(_mxu_dot(f, w1) + bias[1:2, :], 0.0)        # head hidden Linear+ReLU
    out = _mxu_dot(h, w2) + bias[2:3, :]                        # head output Linear
    return f, out


def _moco_pair_kernel(x0_ref, x1_ref,
                      wbq_ref, bq_ref, w1q_ref, w2q_ref,
                      wbk_ref, bk_ref, w1k_ref, w2k_ref,
                      out0_ref, f0_ref, out1_ref, f1_ref,
                      acc0_ref, acc1_ref, *, inv_hw):
    """Query branch (regular weights) + key branch (momentum weights) in one launch.

    Grid = (batch tiles [parallel], spatial tiles [arbitrary reduction]).
    The pooled sums accumulate across the spatial axis; the three matmuls and
    the output stores run once per batch tile on the last spatial step.
    """
    j = pl.program_id(1)

    @pl.when(j == 0)
    def _():
        acc0_ref[...] = jnp.zeros_like(acc0_ref)
        acc1_ref[...] = jnp.zeros_like(acc1_ref)

    # Partial global-average-pool: f32 sum over the lane (H*W) axis (XLU).
    acc0_ref[...] += jnp.sum(x0_ref[...], axis=-1)
    acc1_ref[...] += jnp.sum(x1_ref[...], axis=-1)

    @pl.when(j == pl.num_programs(1) - 1)
    def _():
        f0, out0 = _head(acc0_ref[...] * inv_hw, wbq_ref[...], bq_ref[...],
                         w1q_ref[...], w2q_ref[...])
        f0_ref[...] = f0
        out0_ref[...] = out0
        f1, out1 = _head(acc1_ref[...] * inv_hw, wbk_ref[...], bk_ref[...],
                         w1k_ref[...], w2k_ref[...])
        f1_ref[...] = f1
        out1_ref[...] = out1


def _moco_single_kernel(x_ref, wb_ref, b_ref, w1_ref, w2_ref,
                        out_ref, f_ref, acc_ref, *, inv_hw):
    j = pl.program_id(1)

    @pl.when(j == 0)
    def _():
        acc_ref[...] = jnp.zeros_like(acc_ref)

    acc_ref[...] += jnp.sum(x_ref[...], axis=-1)

    @pl.when(j == pl.num_programs(1) - 1)
    def _():
        f, out = _head(acc_ref[...] * inv_hw, wb_ref[...], b_ref[...],
                       w1_ref[...], w2_ref[...])
        f_ref[...] = f
        out_ref[...] = out


def _momentum_kernel(pm_wb, pm_b, pm_w1, pm_w2, p_wb, p_b, p_w1, p_w2,
                     o_wb, o_b, o_w1, o_w2, *, m):
    """Fused EMA  pm <- m*pm + (1-m)*p  for every parameter tensor (one launch)."""
    o_wb[...] = m * pm_wb[...] + (1.0 - m) * p_wb[...]
    o_b[...] = m * pm_b[...] + (1.0 - m) * p_b[...]
    o_w1[...] = m * pm_w1[...] + (1.0 - m) * p_w1[...]
    o_w2[...] = m * pm_w2[...] + (1.0 - m) * p_w2[...]


# ---------------------------------------------------------------------------
# Wrappers
# ---------------------------------------------------------------------------
def momentum_update(momentum_params, params, m=MOMENTUM):
    """Single fused EMA pallas_call over all parameter tensors (in-place via aliasing)."""
    pm = [momentum_params[k] for k in _PARAM_KEYS]
    p = [params[k] for k in _PARAM_KEYS]
    new = pl.pallas_call(
        functools.partial(_momentum_kernel, m=float(m)),
        out_shape=tuple(jax.ShapeDtypeStruct(t.shape, t.dtype) for t in pm),
        in_specs=[_VMEM_FULL] * (2 * len(_PARAM_KEYS)),
        out_specs=tuple([_VMEM_FULL] * len(_PARAM_KEYS)),
        # momentum buffers are updated in place (true in-place when donated).
        input_output_aliases={i: i for i in range(len(_PARAM_KEYS))},
    )(*pm, *p)
    return dict(zip(_PARAM_KEYS, new))


def _pick_tiles(B, C, HW, n_branches):
    """Pick (batch tile, spatial tile).

    Batch tile: 8-sublane aligned, <=128.  The spatial axis is tiled FIRST when
    the working set exceeds the VMEM budget (keeps the MXU M-dim large); the
    batch tile only shrinks if even a 512-lane spatial tile does not fit.
    """
    tb = 128
    for cand in (8, 16, 32, 64, 128):
        if cand >= B:
            tb = cand
            break

    c_pad = _round_up(C, 8)
    w_bytes = (c_pad * F_PAD + 8 * F_PAD + F_PAD * F_PAD + F_PAD * OUT_DIM) * 4

    def vmem_bytes(tb_, thw_):
        x_tile = tb_ * c_pad * _round_up(thw_, 128) * 4        # f32, tiled layout
        io_tile = tb_ * F_PAD * 4
        acc = tb_ * 128 * 4
        # double-buffered x tile + double-buffered (out, f) tiles
        # + (conservatively) double-buffered resident weights + accumulator
        return n_branches * (2 * x_tile + 2 * 2 * io_tile + 2 * w_bytes + acc)

    thw = HW
    while thw > 512 and vmem_bytes(tb, thw) > _VMEM_BUDGET:
        thw = _round_up(max(thw // 2, 512), 128)
    while tb > 8 and vmem_bytes(tb, thw) > _VMEM_BUDGET:
        tb //= 2
    return tb, thw


def _weight_specs(C):
    # Whole-array weight blocks with a constant index_map: resident across grid steps.
    return [
        pl.BlockSpec((C, F_PAD), lambda i, j: (0, 0)),         # backbone weight
        pl.BlockSpec((8, F_PAD), lambda i, j: (0, 0)),         # fused bias block (bb, b1, b2)
        pl.BlockSpec((F_PAD, F_PAD), lambda i, j: (0, 0)),     # head weight 1
        pl.BlockSpec((F_PAD, OUT_DIM), lambda i, j: (0, 0)),   # head weight 2
    ]


def _prep_x(x_nchw, b_pad, hw_pad):
    B, C, H, W = x_nchw.shape
    x = x_nchw.reshape(B, C, H * W).astype(jnp.float32)
    pad_b, pad_hw = b_pad - B, hw_pad - H * W
    if pad_b or pad_hw:
        # zero padding: spatial zeros do not change the pooled SUM (we multiply
        # by 1/true_HW), batch padding rows are sliced off on return.
        x = jnp.pad(x, ((0, pad_b), (0, 0), (0, pad_hw)))
    return x


def _compiler_params():
    return pltpu.CompilerParams(dimension_semantics=("parallel", "arbitrary"),
                                vmem_limit_bytes=_VMEM_LIMIT)


def _encode_pair(x0, x1, params, momentum_params):
    """Run query branch on `params` and key branch on `momentum_params` in one launch."""
    B, C, H, W = x0.shape
    HW = H * W
    tb, thw = _pick_tiles(B, C, HW, n_branches=2)
    b_pad = _round_up(B, tb)
    hw_pad = _round_up(HW, thw)
    x0p = _prep_x(x0, b_pad, hw_pad)
    x1p = _prep_x(x1, b_pad, hw_pad)

    x_spec = pl.BlockSpec((tb, C, thw), lambda i, j: (i, 0, j))
    out_spec = pl.BlockSpec((tb, OUT_DIM), lambda i, j: (i, 0))
    f_spec = pl.BlockSpec((tb, F_PAD), lambda i, j: (i, 0))
    out_sds = jax.ShapeDtypeStruct((b_pad, OUT_DIM), jnp.float32)
    f_sds = jax.ShapeDtypeStruct((b_pad, F_PAD), jnp.float32)

    out0, f0, out1, f1 = pl.pallas_call(
        functools.partial(_moco_pair_kernel, inv_hw=1.0 / HW),
        grid=(b_pad // tb, hw_pad // thw),
        in_specs=[x_spec, x_spec] + _weight_specs(C) + _weight_specs(C),
        out_specs=(out_spec, f_spec, out_spec, f_spec),
        out_shape=(out_sds, f_sds, out_sds, f_sds),
        scratch_shapes=[pltpu.VMEM((tb, C), jnp.float32),
                        pltpu.VMEM((tb, C), jnp.float32)],
        compiler_params=_compiler_params(),
    )(x0p, x1p,
      params["wb"], params["bias"], params["w1"], params["w2"],
      momentum_params["wb"], momentum_params["bias"],
      momentum_params["w1"], momentum_params["w2"])

    return (out0[:B], f0[:B, :NUM_FTRS], out1[:B], f1[:B, :NUM_FTRS])


def _encode_single(x, params):
    B, C, H, W = x.shape
    HW = H * W
    tb, thw = _pick_tiles(B, C, HW, n_branches=1)
    b_pad = _round_up(B, tb)
    hw_pad = _round_up(HW, thw)
    xp = _prep_x(x, b_pad, hw_pad)

    x_spec = pl.BlockSpec((tb, C, thw), lambda i, j: (i, 0, j))
    out_spec = pl.BlockSpec((tb, OUT_DIM), lambda i, j: (i, 0))
    f_spec = pl.BlockSpec((tb, F_PAD), lambda i, j: (i, 0))

    out, f = pl.pallas_call(
        functools.partial(_moco_single_kernel, inv_hw=1.0 / HW),
        grid=(b_pad // tb, hw_pad // thw),
        in_specs=[x_spec] + _weight_specs(C),
        out_specs=(out_spec, f_spec),
        out_shape=(jax.ShapeDtypeStruct((b_pad, OUT_DIM), jnp.float32),
                   jax.ShapeDtypeStruct((b_pad, F_PAD), jnp.float32)),
        scratch_shapes=[pltpu.VMEM((tb, C), jnp.float32)],
        compiler_params=_compiler_params(),
    )(xp, params["wb"], params["bias"], params["w1"], params["w2"])

    return out[:B], f[:B, :NUM_FTRS]


def moco_forward(params, momentum_params, x0, x1=None, return_features=False,
                 m=MOMENTUM):
    """Functional equivalent of MoCo.forward (batch_shuffle=False).

    Returns (out0, out1_or_None, new_momentum_params) — momentum state is returned
    explicitly since JAX is functional.
    """
    # Momentum update of the key encoder happens first (as in the PyTorch module).
    new_momentum_params = momentum_update(momentum_params, params, m)

    if x1 is None:
        out0, f0 = _encode_single(x0, params)
        res0 = (out0, f0) if return_features else out0
        return res0, None, new_momentum_params

    # TODO(synk): batch_shuffle path (distributed-BN shuffling) not implemented.
    out0, f0, out1, f1 = _encode_pair(x0, x1, params, new_momentum_params)
    res0 = (out0, f0) if return_features else out0
    res1 = (out1, f1) if return_features else out1
    return res0, res1, new_momentum_params


# ---------------------------------------------------------------------------
# Parameter setup (padded, lane-dense layout; padding regions are zero)
# ---------------------------------------------------------------------------
def init_params(key, in_channels):
    ks = jax.random.split(key, 3)
    sb = 1.0 / jnp.sqrt(in_channels)
    s1 = 1.0 / jnp.sqrt(NUM_FTRS)
    wb = jax.random.uniform(ks[0], (in_channels, NUM_FTRS), jnp.float32, -sb, sb)
    w1 = jax.random.uniform(ks[1], (NUM_FTRS, NUM_FTRS), jnp.float32, -s1, s1)
    w2 = jax.random.uniform(ks[2], (NUM_FTRS, OUT_DIM), jnp.float32, -s1, s1)
    params = {
        # backbone Linear(C, NUM_FTRS), columns padded to 128
        "wb": jnp.zeros((in_channels, F_PAD), jnp.float32).at[:, :NUM_FTRS].set(wb),
        # fused bias block: row 0 = backbone bias, row 1 = head bias1, row 2 = head bias2
        # (biases initialized to zero; only the active sub-ranges may be set non-zero)
        "bias": jnp.zeros((8, F_PAD), jnp.float32),
        # projection head Linear(NUM_FTRS, NUM_FTRS), padded to 128x128
        "w1": jnp.zeros((F_PAD, F_PAD), jnp.float32).at[:NUM_FTRS, :NUM_FTRS].set(w1),
        # projection head Linear(NUM_FTRS, OUT_DIM), rows padded to 128
        "w2": jnp.zeros((F_PAD, OUT_DIM), jnp.float32).at[:NUM_FTRS, :].set(w2),
    }
    return params


# Pure-JAX reference (f32 throughout) for a correctness sanity check.
def _ref_branch(x_nchw, p):
    B, C, H, W = x_nchw.shape
    pooled = x_nchw.reshape(B, C, H * W).astype(jnp.float32).mean(-1)
    f = jnp.maximum(pooled @ p["wb"] + p["bias"][0:1], 0.0)
    h = jnp.maximum(f @ p["w1"] + p["bias"][1:2], 0.0)
    out = h @ p["w2"] + p["bias"][2:3]
    return f[:, :NUM_FTRS], out[:, :OUT_DIM]


if __name__ == "__main__":
    B, C, H, W = 2, 4, 16, 16
    key = jax.random.PRNGKey(0)
    k_x0, k_x1, k_p = jax.random.split(key, 3)

    x0 = jax.random.normal(k_x0, (B, C, H, W), jnp.float32)
    x1 = jax.random.normal(k_x1, (B, C, H, W), jnp.float32)

    params = init_params(k_p, C)
    # _init_momentum_encoder: momentum encoder starts as a copy of the encoder.
    momentum_params = {k: v.copy() for k, v in params.items()}

    # two inputs, two outputs, with features
    (out0, f0), (out1, f1), momentum_params = moco_forward(
        params, momentum_params, x0, x1, return_features=True)

    # single-input path
    out_single, none_out, momentum_params = moco_forward(
        params, momentum_params, x0)

    jax.block_until_ready((out0, f0, out1, f1, out_single, momentum_params))
    assert out0.shape == (B, OUT_DIM) and out1.shape == (B, OUT_DIM)
    assert f0.shape == (B, NUM_FTRS) and f1.shape == (B, NUM_FTRS)
    assert none_out is None and out_single.shape == (B, OUT_DIM)

    # Correctness check vs f32 pure-JAX reference (bf16 MXU inputs -> loose tol).
    f0_ref, out0_ref = _ref_branch(x0, params)
    f1_ref, out1_ref = _ref_branch(x1, momentum_params)  # EMA of identical params is a no-op
    assert jnp.allclose(out0, out0_ref, rtol=2e-2, atol=2e-2)
    assert jnp.allclose(f0, f0_ref, rtol=2e-2, atol=2e-2)
    assert jnp.allclose(out1, out1_ref, rtol=2e-2, atol=2e-2)
    assert jnp.allclose(f1, f1_ref, rtol=2e-2, atol=2e-2)
    assert jnp.allclose(out_single, out0_ref, rtol=2e-2, atol=2e-2)

    print("KERNEL_OK")
</pallas_src>

<mosaic_0001>
module attributes {stable_mosaic.version = 11 : i64} {
  func.func @_momentum_kernel(%arg0: memref<4x128xf32, #tpu.memory_space<vmem>>, %arg1: memref<8x128xf32, #tpu.memory_space<vmem>>, %arg2: memref<128x128xf32, #tpu.memory_space<vmem>>, %arg3: memref<128x128xf32, #tpu.memory_space<vmem>>, %arg4: memref<4x128xf32, #tpu.memory_space<vmem>>, %arg5: memref<8x128xf32, #tpu.memory_space<vmem>>, %arg6: memref<128x128xf32, #tpu.memory_space<vmem>>, %arg7: memref<128x128xf32, #tpu.memory_space<vmem>>, %arg8: memref<4x128xf32, #tpu.memory_space<vmem>>, %arg9: memref<8x128xf32, #tpu.memory_space<vmem>>, %arg10: memref<128x128xf32, #tpu.memory_space<vmem>>, %arg11: memref<128x128xf32, #tpu.memory_space<vmem>>) attributes {dimension_semantics = [], scalar_prefetch = 0 : i64, scratch_operands = 0 : i64, tpu.core_type = #tpu.core_type<tc>} {
    %c0 = arith.constant 0 : index
    %c0_0 = arith.constant 0 : index
    %0 = vector.load %arg0[%c0, %c0_0] : memref<4x128xf32, #tpu.memory_space<vmem>>, vector<4x128xf32>
    %cst = arith.constant 9.990000e-01 : f32
    %1 = vector.broadcast %cst : f32 to vector<4x128xf32>
    %2 = arith.mulf %1, %0 : vector<4x128xf32>
    %c0_1 = arith.constant 0 : index
    %c0_2 = arith.constant 0 : index
    %3 = vector.load %arg4[%c0_1, %c0_2] : memref<4x128xf32, #tpu.memory_space<vmem>>, vector<4x128xf32>
    %cst_3 = arith.constant 1.000000e-03 : f32
    %4 = vector.broadcast %cst_3 : f32 to vector<4x128xf32>
    %5 = arith.mulf %4, %3 : vector<4x128xf32>
    %6 = arith.addf %2, %5 : vector<4x128xf32>
    %c0_4 = arith.constant 0 : index
    %c0_5 = arith.constant 0 : index
    %7 = vector.load %arg8[%c0_4, %c0_5] : memref<4x128xf32, #tpu.memory_space<vmem>>, vector<4x128xf32>
    tpu.vector_store %arg8[%c0_4, %c0_5], %6 {strides = array<i32>} : memref<4x128xf32, #tpu.memory_space<vmem>>, vector<4x128xf32>,
    %c0_6 = arith.constant 0 : index
    %c0_7 = arith.constant 0 : index
    %8 = vector.load %arg1[%c0_6, %c0_7] : memref<8x128xf32, #tpu.memory_space<vmem>>, vector<8x128xf32>
    %cst_8 = arith.constant 9.990000e-01 : f32
    %9 = vector.broadcast %cst_8 : f32 to vector<8x128xf32>
    %10 = arith.mulf %9, %8 : vector<8x128xf32>
    %c0_9 = arith.constant 0 : index
    %c0_10 = arith.constant 0 : index
    %11 = vector.load %arg5[%c0_9, %c0_10] : memref<8x128xf32, #tpu.memory_space<vmem>>, vector<8x128xf32>
    %cst_11 = arith.constant 1.000000e-03 : f32
    %12 = vector.broadcast %cst_11 : f32 to vector<8x128xf32>
    %13 = arith.mulf %12, %11 : vector<8x128xf32>
    %14 = arith.addf %10, %13 : vector<8x128xf32>
    %c0_12 = arith.constant 0 : index
    %c0_13 = arith.constant 0 : index
    %15 = vector.load %arg9[%c0_12, %c0_13] : memref<8x128xf32, #tpu.memory_space<vmem>>, vector<8x128xf32>
    tpu.vector_store %arg9[%c0_12, %c0_13], %14 {strides = array<i32>} : memref<8x128xf32, #tpu.memory_space<vmem>>, vector<8x128xf32>,
    %c0_14 = arith.constant 0 : index
    %c0_15 = arith.constant 0 : index
    %16 = vector.load %arg2[%c0_14, %c0_15] : memref<128x128xf32, #tpu.memory_space<vmem>>, vector<128x128xf32>
    %cst_16 = arith.constant 9.990000e-01 : f32
    %17 = vector.broadcast %cst_16 : f32 to vector<128x128xf32>
    %18 = arith.mulf %17, %16 : vector<128x128xf32>
    %c0_17 = arith.constant 0 : index
    %c0_18 = arith.constant 0 : index
    %19 = vector.load %arg6[%c0_17, %c0_18] : memref<128x128xf32, #tpu.memory_space<vmem>>, vector<128x128xf32>
    %cst_19 = arith.constant 1.000000e-03 : f32
    %20 = vector.broadcast %cst_19 : f32 to vector<128x128xf32>
    %21 = arith.mulf %20, %19 : vector<128x128xf32>
    %22 = arith.addf %18, %21 : vector<128x128xf32>
    %c0_20 = arith.constant 0 : index
    %c0_21 = arith.constant 0 : index
    %23 = vector.load %arg10[%c0_20, %c0_21] : memref<128x128xf32, #tpu.memory_space<vmem>>, vector<128x128xf32>
    tpu.vector_store %arg10[%c0_20, %c0_21], %22 {strides = array<i32>} : memref<128x128xf32, #tpu.memory_space<vmem>>, vector<128x128xf32>,
    %c0_22 = arith.constant 0 : index
    %c0_23 = arith.constant 0 : index
    %24 = vector.load %arg3[%c0_22, %c0_23] : memref<128x128xf32, #tpu.memory_space<vmem>>, vector<128x128xf32>
    %cst_24 = arith.constant 9.990000e-01 : f32
    %25 = vector.broadcast %cst_24 : f32 to vector<128x128xf32>
    %26 = arith.mulf %25, %24 : vector<128x128xf32>
    %c0_25 = arith.constant 0 : index
    %c0_26 = arith.constant 0 : index
    %27 = vector.load %arg7[%c0_25, %c0_26] : memref<128x128xf32, #tpu.memory_space<vmem>>, vector<128x128xf32>
    %cst_27 = arith.constant 1.000000e-03 : f32
    %28 = vector.broadcast %cst_27 : f32 to vector<128x128xf32>
    %29 = arith.mulf %28, %27 : vector<128x128xf32>
    %30 = arith.addf %26, %29 : vector<128x128xf32>
    %c0_28 = arith.constant 0 : index
    %c0_29 = arith.constant 0 : index
    %31 = vector.load %arg11[%c0_28, %c0_29] : memref<128x128xf32, #tpu.memory_space<vmem>>, vector<128x128xf32>
    tpu.vector_store %arg11[%c0_28, %c0_29], %30 {strides = array<i32>} : memref<128x128xf32, #tpu.memory_space<vmem>>, vector<128x128xf32>,
    return
  }
}

</mosaic_0001>

<llo_original>
// kernel: tpu_custom_call.1
$region0: #{tpu_custom_call.1}
  #allocation0 [shape = 'u32[]', space=smem, size = 0x4, offset = 0x4, fixed_abs, tag = 'smem constant byte address 0x4 - core index']
  #allocation1 [shape = 'u32[144,128]{1,0:T(1,128)}', space=vmem, size = 0x12000, scoped, tag = 'internal scratch']
  %s0 = inlined_call_operand.hbm [shape: f32[4,128], index: 0, kind: input, shape index: {}, may-alias: {0,8}]
  %s1 = inlined_call_operand.hbm [shape: f32[8,128], index: 1, kind: input, shape index: {}, may-alias: {1,9}]
  %s2 = inlined_call_operand.hbm [shape: f32[128,128], index: 2, kind: input, shape index: {}, may-alias: {2,10}]
  %s3 = inlined_call_operand.hbm [shape: f32[128,128], index: 3, kind: input, shape index: {}, may-alias: {3,11}]
  %s4 = inlined_call_operand.vmem [shape: f32[4,128], index: 4, kind: input, shape index: {}]
  %s5 = inlined_call_operand.vmem [shape: f32[8,128], index: 5, kind: input, shape index: {}]
  %s6 = inlined_call_operand.vmem [shape: f32[128,128], index: 6, kind: input, shape index: {}]
  %s7 = inlined_call_operand.vmem [shape: f32[128,128], index: 7, kind: input, shape index: {}]
  %s8 = inlined_call_operand.hbm [shape: f32[4,128], index: 8, kind: output, shape index: {0}, may-alias: {0,8}]
  %s9 = inlined_call_operand.hbm [shape: f32[8,128], index: 9, kind: output, shape index: {1}, may-alias: {1,9}]
  %s10 = inlined_call_operand.hbm [shape: f32[128,128], index: 10, kind: output, shape index: {2}, may-alias: {2,10}]
  %s11 = inlined_call_operand.hbm [shape: f32[128,128], index: 11, kind: output, shape index: {3}, may-alias: {3,11}]
  %12 = xla_tuple %s8, %s9, %s10, %s11
  %s13 = sld [smem:[#allocation0]]
  $region82: #{tpu_custom_call.1} parent=0
    _
  %s15 = ssub.s32 1, %s13
  %s16 = scalar_select 0, %s15, %s13
  $region1: #{tpu_custom_call.1} parent=0
    #allocation2 [shape = 'u8[2048]{0}', space=vmem, size = 0x800, scoped, tag = 'input window, operand 0, single buffered']
    #allocation3 [shape = 's32[1]{0}', space=sflag, size = 0x4, scoped, tag = 'scoped memory for tpu_custom_call.1']
    #allocation4 [shape = 's32[1]{0}', space=sflag, size = 0x4, scoped, tag = 'scoped memory for tpu_custom_call.1']
    #allocation5 [shape = 'u8[4096]{0}', space=vmem, size = 0x1000, scoped, tag = 'input window, operand 1, single buffered']
    #allocation6 [shape = 's32[1]{0}', space=sflag, size = 0x4, scoped, tag = 'scoped memory for tpu_custom_call.1']
    #allocation7 [shape = 'u8[65536]{0}', space=vmem, size = 0x10000, scoped, tag = 'input window, operand 2, single buffered']
    #allocation8 [shape = 'u8[65536]{0}', space=vmem, size = 0x10000, scoped, tag = 'input window, operand 3, single buffered']
    #allocation9 [shape = 's32[1]{0}', space=sflag, size = 0x4, scoped, tag = 'scoped memory for tpu_custom_call.1']
    #allocation10 [shape = 'u8[2048]{0}', space=vmem, size = 0x800, scoped, tag = 'output window, operand 0, single buffered']
    #allocation11 [shape = 'u8[4096]{0}', space=vmem, size = 0x1000, scoped, tag = 'output window, operand 1, single buffered']
    #allocation12 [shape = 's32[1]{0}', space=sflag, size = 0x4, scoped, tag = 'scoped memory for tpu_custom_call.1']
    #allocation13 [shape = 'u8[65536]{0}', space=vmem, size = 0x10000, scoped, tag = 'output window, operand 2, single buffered']
    #allocation14 [shape = 'u8[65536]{0}', space=vmem, size = 0x10000, scoped, tag = 'output window, operand 3, single buffered']
    #allocation15 [shape = 's32[1]{0}', space=sflag, size = 0x4, scoped, tag = 'scoped memory for tpu_custom_call.1']
    %17 = vsyncpa [#allocation3], 0
    %18 = vsyncpa [#allocation6], 0
    %19 = vsyncpa [#allocation9], 0
    %20 = vsyncpa [#allocation4], 0
    %21 = vsyncpa [#allocation12], 0
    %22 = vsyncpa [#allocation15], 0
    // Predicated region
    $region2: #{tpu_custom_call.1} parent=1 // pred_check
      _
    $region3: #{tpu_custom_call.1} parent=1 // pred_check_branch
      %24 = sbr.rel (0) target = $region5
    $region4: #{tpu_custom_call.1} parent=1 // pred_region
      %s26 = ssub.s32 64, 64
      %27 = vsyncadd [#allocation3], %s26
      %s29 = sshll.u32 [#allocation2], 4
      %s30 = int_to_ptr.vmem [resolvable:$true] %s29
      %32 = dma.hbm_to_vmem [thread:$0]  %s0, 64, %s30, [#allocation3]
    $region5: #{tpu_custom_call.1} parent=1 // pred_fallthru
      _
    // Predicated region
    $region6: #{tpu_custom_call.1} parent=1 // pred_check
      _
    $region7: #{tpu_custom_call.1} parent=1 // pred_check_branch
      %34 = sbr.rel (0) target = $region9
    $region8: #{tpu_custom_call.1} parent=1 // pred_region
      %s36 = ssub.s32 128, 128
      %37 = vsyncadd [#allocation6], %s36
      %s39 = sshll.u32 [#allocation5], 4
      %s40 = int_to_ptr.vmem [resolvable:$true] %s39
      %42 = dma.hbm_to_vmem [thread:$0]  %s1, 128, %s40, [#allocation6]
    $region9: #{tpu_custom_call.1} parent=1 // pred_fallthru
      _
    // Predicated region
    $region10: #{tpu_custom_call.1} parent=1 // pred_check
      _
    $region11: #{tpu_custom_call.1} parent=1 // pred_check_branch
      %44 = sbr.rel (0) target = $region13
    $region12: #{tpu_custom_call.1} parent=1 // pred_region
      %s46 = ssub.s32 2048, 2048
      %47 = vsyncadd [#allocation6], %s46
      %s48 = sshll.u32 [#allocation7], 4
      %s49 = int_to_ptr.vmem [resolvable:$true] %s48
      %54 = dma.hbm_to_vmem [thread:$0]  %s2, 2048, %s49, [#allocation6], 128, 128, 8
    $region13: #{tpu_custom_call.1} parent=1 // pred_fallthru
      _
    // Predicated region
    $region14: #{tpu_custom_call.1} parent=1 // pred_check
      _
    $region15: #{tpu_custom_call.1} parent=1 // pred_check_branch
      %56 = sbr.rel (0) target = $region17
    $region16: #{tpu_custom_call.1} parent=1 // pred_region
      %s58 = ssub.s32 2048, 2048
      %59 = vsyncadd [#allocation9], %s58
      %s60 = sshll.u32 [#allocation8], 4
      %s61 = int_to_ptr.vmem [resolvable:$true] %s60
      %66 = dma.hbm_to_vmem [thread:$0]  %s3, 2048, %s61, [#allocation9], 128, 128, 8
    $region17: #{tpu_custom_call.1} parent=1 // pred_fallthru
      _
    // Predicated region
    $region18: #{tpu_custom_call.1} parent=1 // pred_check
      _
    $region19: #{tpu_custom_call.1} parent=1 // pred_check_branch
      %68 = sbr.rel (0) target = $region21
    $region20: #{tpu_custom_call.1} parent=1 // pred_region
      _
    $region21: #{tpu_custom_call.1} parent=1 // pred_fallthru
      _
    // Predicated region
    $region22: #{tpu_custom_call.1} parent=1 // pred_check
      _
    $region23: #{tpu_custom_call.1} parent=1 // pred_check_branch
      %70 = sbr.rel (0) target = $region25
    $region24: #{tpu_custom_call.1} parent=1 // pred_region
      _
    $region25: #{tpu_custom_call.1} parent=1 // pred_fallthru
      _
    // Predicated region
    $region26: #{tpu_custom_call.1} parent=1 // pred_check
      _
    $region27: #{tpu_custom_call.1} parent=1 // pred_check_branch
      %72 = sbr.rel (0) target = $region29
    $region28: #{tpu_custom_call.1} parent=1 // pred_region
      _
    $region29: #{tpu_custom_call.1} parent=1 // pred_fallthru
      _
    // Predicated region
    $region30: #{tpu_custom_call.1} parent=1 // pred_check
      _
    $region31: #{tpu_custom_call.1} parent=1 // pred_check_branch
      %74 = sbr.rel (0) target = $region33
    $region32: #{tpu_custom_call.1} parent=1 // pred_region
      _
    $region33: #{tpu_custom_call.1} parent=1 // pred_fallthru
      _
    // Predicated region
    $region34: #{tpu_custom_call.1} parent=1 // pred_check
      _
    $region35: #{tpu_custom_call.1} parent=1 // pred_check_branch
      %76 = sbr.rel (0) target = $region37
    $region36: #{tpu_custom_call.1} parent=1 // pred_region
      %77 = dma.done [#allocation3], 64
    $region37: #{tpu_custom_call.1} parent=1 // pred_fallthru
      _
    // Predicated region
    $region38: #{tpu_custom_call.1} parent=1 // pred_check
      _
    $region39: #{tpu_custom_call.1} parent=1 // pred_check_branch
      %79 = sbr.rel (0) target = $region41
    $region40: #{tpu_custom_call.1} parent=1 // pred_region
      %80 = dma.done [#allocation6], 128
    $region41: #{tpu_custom_call.1} parent=1 // pred_fallthru
      _
    // Predicated region
    $region42: #{tpu_custom_call.1} parent=1 // pred_check
      _
    $region43: #{tpu_custom_call.1} parent=1 // pred_check_branch
      %82 = sbr.rel (0) target = $region45
    $region44: #{tpu_custom_call.1} parent=1 // pred_region
      %83 = dma.done [#allocation6], 2048
    $region45: #{tpu_custom_call.1} parent=1 // pred_fallthru
      _
    // Predicated region
    $region46: #{tpu_custom_call.1} parent=1 // pred_check
      _
    $region47: #{tpu_custom_call.1} parent=1 // pred_check_branch
      %85 = sbr.rel (0) target = $region49
    $region48: #{tpu_custom_call.1} parent=1 // pred_region
      %86 = dma.done [#allocation9], 2048
    $region49: #{tpu_custom_call.1} parent=1 // pred_fallthru
      _
    %v87 = vld [vmem:[#allocation2] sm:$0xf]
    %v88 = vmul.f32 %v87, 0.999
    %v89 = vld [vmem:[%s4] sm:$0xf]
    %v90 = vmul.f32 %v89, 0.001
    %v91 = vadd.f32 %v88, %v90
    %92 = vst [vmem:[#allocation10] sm:$0xf] %v91
    %v93 = vld [vmem:[#allocation5] sm:$0xff]
    %v94 = vmul.f32 %v93, 0.999
    %v95 = vld [vmem:[%s5] sm:$0xff]
    %v96 = vmul.f32 %v95, 0.001
    %v97 = vadd.f32 %v94, %v96
    %98 = vst [vmem:[#allocation11] sm:$0xff] %v97
    %v99 = vld [vmem:[#allocation7] sm:$0xff]
    %v100 = vld [vmem:[#allocation7 + $0x8] sm:$0xff]
    %v101 = vld [vmem:[#allocation7 + $0x10] sm:$0xff]
    %v102 = vld [vmem:[#allocation7 + $0x18] sm:$0xff]
    %v103 = vld [vmem:[#allocation7 + $0x20] sm:$0xff]
    %v104 = vld [vmem:[#allocation7 + $0x28] sm:$0xff]
    %v105 = vld [vmem:[#allocation7 + $0x30] sm:$0xff]
    %v106 = vld [vmem:[#allocation7 + $0x38] sm:$0xff]
    %v107 = vld [vmem:[#allocation7 + $0x40] sm:$0xff]
    %v108 = vld [vmem:[#allocation7 + $0x48] sm:$0xff]
    %v109 = vld [vmem:[#allocation7 + $0x50] sm:$0xff]
    %v110 = vld [vmem:[#allocation7 + $0x58] sm:$0xff]
    %v111 = vld [vmem:[#allocation7 + $0x60] sm:$0xff]
    %v112 = vld [vmem:[#allocation7 + $0x68] sm:$0xff]
    %v113 = vld [vmem:[#allocation7 + $0x70] sm:$0xff]
    %v114 = vld [vmem:[#allocation7 + $0x78] sm:$0xff]
    %v115 = vmul.f32 %v99, 0.999
    %v116 = vmul.f32 %v100, 0.999
    %v117 = vmul.f32 %v101, 0.999
    %v118 = vmul.f32 %v102, 0.999
    %v119 = vmul.f32 %v103, 0.999
    %v120 = vmul.f32 %v104, 0.999
    %v121 = vmul.f32 %v105, 0.999
    %v122 = vmul.f32 %v106, 0.999
    %v123 = vmul.f32 %v107, 0.999
    %v124 = vmul.f32 %v108, 0.999
    %v125 = vmul.f32 %v109, 0.999
    %v126 = vmul.f32 %v110, 0.999
    %v127 = vmul.f32 %v111, 0.999
    %v128 = vmul.f32 %v112, 0.999
    %v129 = vmul.f32 %v113, 0.999
    %v130 = vmul.f32 %v114, 0.999
    %v131 = vld [vmem:[%s6] sm:$0xff]
    %v132 = vld [vmem:[%s6 + $0x8] sm:$0xff]
    %v133 = vld [vmem:[%s6 + $0x10] sm:$0xff]
    %v134 = vld [vmem:[%s6 + $0x18] sm:$0xff]
    %v135 = vld [vmem:[%s6 + $0x20] sm:$0xff]
    %v136 = vld [vmem:[%s6 + $0x28] sm:$0xff]
    %v137 = vld [vmem:[%s6 + $0x30] sm:$0xff]
    %v138 = vld [vmem:[%s6 + $0x38] sm:$0xff]
    %v139 = vld [vmem:[%s6 + $0x40] sm:$0xff]
    %v140 = vld [vmem:[%s6 + $0x48] sm:$0xff]
    %v141 = vld [vmem:[%s6 + $0x50] sm:$0xff]
    %v142 = vld [vmem:[%s6 + $0x58] sm:$0xff]
    %v143 = vld [vmem:[%s6 + $0x60] sm:$0xff]
    %v144 = vld [vmem:[%s6 + $0x68] sm:$0xff]
    %v145 = vld [vmem:[%s6 + $0x70] sm:$0xff]
    %v146 = vld [vmem:[%s6 + $0x78] sm:$0xff]
    %v147 = vmul.f32 %v131, 0.001
    %v148 = vmul.f32 %v132, 0.001
    %v149 = vmul.f32 %v133, 0.001
    %v150 = vmul.f32 %v134, 0.001
    %v151 = vmul.f32 %v135, 0.001
    %v152 = vmul.f32 %v136, 0.001
    %v153 = vmul.f32 %v137, 0.001
    %v154 = vmul.f32 %v138, 0.001
    %v155 = vmul.f32 %v139, 0.001
    %v156 = vmul.f32 %v140, 0.001
    %v157 = vmul.f32 %v141, 0.001
    %v158 = vmul.f32 %v142, 0.001
    %v159 = vmul.f32 %v143, 0.001
    %v160 = vmul.f32 %v144, 0.001
    %v161 = vmul.f32 %v145, 0.001
    %v162 = vmul.f32 %v146, 0.001
    %v163 = vadd.f32 %v115, %v147
    %v164 = vadd.f32 %v116, %v148
    %v165 = vadd.f32 %v117, %v149
    %v166 = vadd.f32 %v118, %v150
    %v167 = vadd.f32 %v119, %v151
    %v168 = vadd.f32 %v120, %v152
    %v169 = vadd.f32 %v121, %v153
    %v170 = vadd.f32 %v122, %v154
    %v171 = vadd.f32 %v123, %v155
    %v172 = vadd.f32 %v124, %v156
    %v173 = vadd.f32 %v125, %v157
    %v174 = vadd.f32 %v126, %v158
    %v175 = vadd.f32 %v127, %v159
    %v176 = vadd.f32 %v128, %v160
    %v177 = vadd.f32 %v129, %v161
    %v178 = vadd.f32 %v130, %v162
    %179 = vst [vmem:[#allocation13] sm:$0xff] %v163
    %180 = vst [vmem:[#allocation13 + $0x8] sm:$0xff] %v164
    %181 = vst [vmem:[#allocation13 + $0x10] sm:$0xff] %v165
    %182 = vst [vmem:[#allocation13 + $0x18] sm:$0xff] %v166
    %183 = vst [vmem:[#allocation13 + $0x20] sm:$0xff] %v167
    %184 = vst [vmem:[#allocation13 + $0x28] sm:$0xff] %v168
    %185 = vst [vmem:[#allocation13 + $0x30] sm:$0xff] %v169
    %186 = vst [vmem:[#allocation13 + $0x38] sm:$0xff] %v170
    %187 = vst [vmem:[#allocation13 + $0x40] sm:$0xff] %v171
    %188 = vst [vmem:[#allocation13 + $0x48] sm:$0xff] %v172
    %189 = vst [vmem:[#allocation13 + $0x50] sm:$0xff] %v173
    %190 = vst [vmem:[#allocation13 + $0x58] sm:$0xff] %v174
    %191 = vst [vmem:[#allocation13 + $0x60] sm:$0xff] %v175
    %192 = vst [vmem:[#allocation13 + $0x68] sm:$0xff] %v176
    %193 = vst [vmem:[#allocation13 + $0x70] sm:$0xff] %v177
    %194 = vst [vmem:[#allocation13 + $0x78] sm:$0xff] %v178
    %v195 = vld [vmem:[#allocation8] sm:$0xff]
    %v196 = vld [vmem:[#allocation8 + $0x8] sm:$0xff]
    %v197 = vld [vmem:[#allocation8 + $0x10] sm:$0xff]
    %v198 = vld [vmem:[#allocation8 + $0x18] sm:$0xff]
    %v199 = vld [vmem:[#allocation8 + $0x20] sm:$0xff]
    %v200 = vld [vmem:[#allocation8 + $0x28] sm:$0xff]
    %v201 = vld [vmem:[#allocation8 + $0x30] sm:$0xff]
    %v202 = vld [vmem:[#allocation8 + $0x38] sm:$0xff]
    %v203 = vld [vmem:[#allocation8 + $0x40] sm:$0xff]
    %v204 = vld [vmem:[#allocation8 + $0x48] sm:$0xff]
    %v205 = vld [vmem:[#allocation8 + $0x50] sm:$0xff]
    %v206 = vld [vmem:[#allocation8 + $0x58] sm:$0xff]
    %v207 = vld [vmem:[#allocation8 + $0x60] sm:$0xff]
    %v208 = vld [vmem:[#allocation8 + $0x68] sm:$0xff]
    %v209 = vld [vmem:[#allocation8 + $0x70] sm:$0xff]
    %v210 = vld [vmem:[#allocation8 + $0x78] sm:$0xff]
    %v211 = vmul.f32 %v195, 0.999
    %v212 = vmul.f32 %v196, 0.999
    %v213 = vmul.f32 %v197, 0.999
    %v214 = vmul.f32 %v198, 0.999
    %v215 = vmul.f32 %v199, 0.999
    %v216 = vmul.f32 %v200, 0.999
    %v217 = vmul.f32 %v201, 0.999
    %v218 = vmul.f32 %v202, 0.999
    %v219 = vmul.f32 %v203, 0.999
    %v220 = vmul.f32 %v204, 0.999
    %v221 = vmul.f32 %v205, 0.999
    %v222 = vmul.f32 %v206, 0.999
    %v223 = vmul.f32 %v207, 0.999
    %v224 = vmul.f32 %v208, 0.999
    %v225 = vmul.f32 %v209, 0.999
    %v226 = vmul.f32 %v210, 0.999
    %v227 = vld [vmem:[%s7] sm:$0xff]
    %v228 = vld [vmem:[%s7 + $0x8] sm:$0xff]
    %v229 = vld [vmem:[%s7 + $0x10] sm:$0xff]
    %v230 = vld [vmem:[%s7 + $0x18] sm:$0xff]
    %v231 = vld [vmem:[%s7 + $0x20] sm:$0xff]
    %v232 = vld [vmem:[%s7 + $0x28] sm:$0xff]
    %v233 = vld [vmem:[%s7 + $0x30] sm:$0xff]
    %v234 = vld [vmem:[%s7 + $0x38] sm:$0xff]
    %v235 = vld [vmem:[%s7 + $0x40] sm:$0xff]
    %v236 = vld [vmem:[%s7 + $0x48] sm:$0xff]
    %v237 = vld [vmem:[%s7 + $0x50] sm:$0xff]
    %v238 = vld [vmem:[%s7 + $0x58] sm:$0xff]
    %v239 = vld [vmem:[%s7 + $0x60] sm:$0xff]
    %v240 = vld [vmem:[%s7 + $0x68] sm:$0xff]
    %v241 = vld [vmem:[%s7 + $0x70] sm:$0xff]
    %v242 = vld [vmem:[%s7 + $0x78] sm:$0xff]
    %v243 = vmul.f32 %v227, 0.001
    %v244 = vmul.f32 %v228, 0.001
    %v245 = vmul.f32 %v229, 0.001
    %v246 = vmul.f32 %v230, 0.001
    %v247 = vmul.f32 %v231, 0.001
    %v248 = vmul.f32 %v232, 0.001
    %v249 = vmul.f32 %v233, 0.001
    %v250 = vmul.f32 %v234, 0.001
    %v251 = vmul.f32 %v235, 0.001
    %v252 = vmul.f32 %v236, 0.001
    %v253 = vmul.f32 %v237, 0.001
    %v254 = vmul.f32 %v238, 0.001
    %v255 = vmul.f32 %v239, 0.001
    %v256 = vmul.f32 %v240, 0.001
    %v257 = vmul.f32 %v241, 0.001
    %v258 = vmul.f32 %v242, 0.001
    %v259 = vadd.f32 %v211, %v243
    %v260 = vadd.f32 %v212, %v244
    %v261 = vadd.f32 %v213, %v245
    %v262 = vadd.f32 %v214, %v246
    %v263 = vadd.f32 %v215, %v247
    %v264 = vadd.f32 %v216, %v248
    %v265 = vadd.f32 %v217, %v249
    %v266 = vadd.f32 %v218, %v250
    %v267 = vadd.f32 %v219, %v251
    %v268 = vadd.f32 %v220, %v252
    %v269 = vadd.f32 %v221, %v253
    %v270 = vadd.f32 %v222, %v254
    %v271 = vadd.f32 %v223, %v255
    %v272 = vadd.f32 %v224, %v256
    %v273 = vadd.f32 %v225, %v257
    %v274 = vadd.f32 %v226, %v258
    %275 = vst [vmem:[#allocation14] sm:$0xff] %v259
    %276 = vst [vmem:[#allocation14 + $0x8] sm:$0xff] %v260
    %277 = vst [vmem:[#allocation14 + $0x10] sm:$0xff] %v261
    %278 = vst [vmem:[#allocation14 + $0x18] sm:$0xff] %v262
    %279 = vst [vmem:[#allocation14 + $0x20] sm:$0xff] %v263
    %280 = vst [vmem:[#allocation14 + $0x28] sm:$0xff] %v264
    %281 = vst [vmem:[#allocation14 + $0x30] sm:$0xff] %v265
    %282 = vst [vmem:[#allocation14 + $0x38] sm:$0xff] %v266
    %283 = vst [vmem:[#allocation14 + $0x40] sm:$0xff] %v267
    %284 = vst [vmem:[#allocation14 + $0x48] sm:$0xff] %v268
    %285 = vst [vmem:[#allocation14 + $0x50] sm:$0xff] %v269
    %286 = vst [vmem:[#allocation14 + $0x58] sm:$0xff] %v270
    %287 = vst [vmem:[#allocation14 + $0x60] sm:$0xff] %v271
    %288 = vst [vmem:[#allocation14 + $0x68] sm:$0xff] %v272
    %289 = vst [vmem:[#allocation14 + $0x70] sm:$0xff] %v273
    %290 = vst [vmem:[#allocation14 + $0x78] sm:$0xff] %v274
    // Predicated region
    $region50: #{tpu_custom_call.1} parent=1 // pred_check
      _
    $region51: #{tpu_custom_call.1} parent=1 // pred_check_branch
      %292 = sbr.rel (0) target = $region53
    $region52: #{tpu_custom_call.1} parent=1 // pred_region
      %s294 = ssub.s32 64, 64
      %295 = vsyncadd [#allocation4], %s294
      %s297 = sshll.u32 [#allocation10], 4
      %s298 = int_to_ptr.vmem [resolvable:$true] %s297
      %300 = dma.vmem_to_hbm [thread:$0]  %s298, 64, %s8, [#allocation4]
    $region53: #{tpu_custom_call.1} parent=1 // pred_fallthru
      _
    // Predicated region
    $region54: #{tpu_custom_call.1} parent=1 // pred_check
      _
    $region55: #{tpu_custom_call.1} parent=1 // pred_check_branch
      %302 = sbr.rel (0) target = $region57
    $region56: #{tpu_custom_call.1} parent=1 // pred_region
      %s304 = ssub.s32 128, 128
      %305 = vsyncadd [#allocation12], %s304
      %s307 = sshll.u32 [#allocation11], 4
      %s308 = int_to_ptr.vmem [resolvable:$true] %s307
      %310 = dma.vmem_to_hbm [thread:$0]  %s308, 128, %s9, [#allocation12]
    $region57: #{tpu_custom_call.1} parent=1 // pred_fallthru
      _
    // Predicated region
    $region58: #{tpu_custom_call.1} parent=1 // pred_check
      _
    $region59: #{tpu_custom_call.1} parent=1 // pred_check_branch
      %312 = sbr.rel (0) target = $region61
    $region60: #{tpu_custom_call.1} parent=1 // pred_region
      %s314 = ssub.s32 2048, 2048
      %315 = vsyncadd [#allocation12], %s314
      %s316 = sshll.u32 [#allocation13], 4
      %s317 = int_to_ptr.vmem [resolvable:$true] %s316
      %322 = dma.vmem_to_hbm [thread:$0]  %s317, 2048, %s10, [#allocation12], 128, 128, 8
    $region61: #{tpu_custom_call.1} parent=1 // pred_fallthru
      _
    // Predicated region
    $region62: #{tpu_custom_call.1} parent=1 // pred_check
      _
    $region63: #{tpu_custom_call.1} parent=1 // pred_check_branch
      %324 = sbr.rel (0) target = $region65
    $region64: #{tpu_custom_call.1} parent=1 // pred_region
      %s326 = ssub.s32 2048, 2048
      %327 = vsyncadd [#allocation15], %s326
      %s328 = sshll.u32 [#allocation14], 4
      %s329 = int_to_ptr.vmem [resolvable:$true] %s328
      %334 = dma.vmem_to_hbm [thread:$0]  %s329, 2048, %s11, [#allocation15], 128, 128, 8
    $region65: #{tpu_custom_call.1} parent=1 // pred_fallthru
      _
    // Predicated region
    $region66: #{tpu_custom_call.1} parent=1 // pred_check
      _
    $region67: #{tpu_custom_call.1} parent=1 // pred_check_branch
      %336 = sbr.rel (0) target = $region69
    $region68: #{tpu_custom_call.1} parent=1 // pred_region
      %337 = dma.done [#allocation4], 64
    $region69: #{tpu_custom_call.1} parent=1 // pred_fallthru
      _
    // Predicated region
    $region70: #{tpu_custom_call.1} parent=1 // pred_check
      _
    $region71: #{tpu_custom_call.1} parent=1 // pred_check_branch
      %339 = sbr.rel (0) target = $region73
    $region72: #{tpu_custom_call.1} parent=1 // pred_region
      %340 = dma.done [#allocation12], 128
    $region73: #{tpu_custom_call.1} parent=1 // pred_fallthru
      _
    // Predicated region
    $region74: #{tpu_custom_call.1} parent=1 // pred_check
      _
    $region75: #{tpu_custom_call.1} parent=1 // pred_check_branch
      %342 = sbr.rel (0) target = $region77
    $region76: #{tpu_custom_call.1} parent=1 // pred_region
      %343 = dma.done [#allocation12], 2048
    $region77: #{tpu_custom_call.1} parent=1 // pred_fallthru
      _
    // Predicated region
    $region78: #{tpu_custom_call.1} parent=1 // pred_check
      _
    $region79: #{tpu_custom_call.1} parent=1 // pred_check_branch
      %345 = sbr.rel (0) target = $region81
    $region80: #{tpu_custom_call.1} parent=1 // pred_region
      %346 = dma.done [#allocation15], 2048
    $region81: #{tpu_custom_call.1} parent=1 // pred_fallthru
      _
    %347 = vsyncpa [#allocation3], 1
    %348 = vsyncpa [#allocation6], 1
    %349 = vsyncpa [#allocation9], 1
    %350 = vsyncpa [#allocation4], 1
    %351 = vsyncpa [#allocation12], 1
    %352 = vsyncpa [#allocation15], 1

</llo_original>
